<compile_context>
chip_gen: v6e
topology: v6e:2x2x1
jax: 0.10.0
libtpu: 0.0.40
codegen_flags: <defaults>
</compile_context>

<pallas_src>
import math

import jax
import jax.numpy as jnp
from jax.experimental import pallas as pl
from jax.experimental.pallas import tpu as pltpu

_GELU_C = math.sqrt(2.0 / math.pi)
_MiB = 1 << 20


def _ffn_kernel(x_ref, w1_ref, b1_ref, w2_ref, b2_ref, o_ref, acc_ref):
    h_idx = pl.program_id(1)

    @pl.when(h_idx == 0)
    def _():
        # Fold the output bias into the accumulator init (saves a (tm,E) finalize add).
        acc_ref[...] = jnp.broadcast_to(b2_ref[...], acc_ref.shape)

    # Linear 1 over this hidden tile: (tm, E) @ (E, th) -> (tm, th), f32 accumulation.
    h = jnp.dot(x_ref[...], w1_ref[...], preferred_element_type=jnp.float32)
    h = h + b1_ref[...]                                   # bias add in f32 (VPU)

    # tanh-GELU in f32, matching the PyTorch GELU module exactly:
    #   0.5*x*(1 + tanh(sqrt(2/pi) * (x + 0.044715*x^3)))
    h2 = h * h
    inner = _GELU_C * (h * (1.0 + 0.044715 * h2))
    g = 0.5 * h * (1.0 + jnp.tanh(inner))

    # Linear 2 partial product for this hidden tile, accumulated into resident scratch.
    acc_ref[...] += jnp.dot(g.astype(w2_ref.dtype), w2_ref[...],
                            preferred_element_type=jnp.float32)

    @pl.when(h_idx == pl.num_programs(1) - 1)
    def _():
        o_ref[...] = acc_ref[...].astype(o_ref.dtype)


def _round_up(x, m):
    return (x + m - 1) // m * m


def _cdiv(a, b):
    return (a + b - 1) // b


def _divisor_tile(H, want):
    """Largest multiple of 128 that divides H and is <= want; None if none exists."""
    best = None
    t = 128
    limit = min(want, H)
    while t <= limit:
        if H % t == 0:
            best = t
        t += 128
    return best


def _vmem_capacity_bytes():
    try:
        info = pltpu.get_tpu_info()
        cap = getattr(info, "vmem_capacity_bytes", None)
        if cap:
            return int(cap)
    except Exception:
        pass
    return 64 * _MiB  # conservative default: fits every generation


def _vmem_needed(tm, th, E, x_isz, w_isz, out_isz):
    return (2 * tm * E * x_isz        # x row tile (double-buffered)
            + 2 * E * th * w_isz      # w1 hidden tile (double-buffered)
            + 2 * th * E * w_isz      # w2 hidden tile (double-buffered)
            + 2 * tm * E * out_isz    # output tile (double-buffered)
            + tm * E * 4              # resident f32 accumulator
            + 2 * tm * th * 4         # h / g f32 temporaries (approx)
            + 4 * (th + E) * 4)       # bias tiles (negligible)


def _select_tiles(M, E, H, x_isz, w_isz, out_isz):
    """Per-generation tm/th and VMEM limit, derived from VMEM capacity."""
    vmem_cap = _vmem_capacity_bytes()
    if vmem_cap <= 64 * _MiB:
        # v7x-like: 64 MiB VMEM per TensorCore, 2 TCs per chip.
        tm_target, th_target = 512, 512
        vmem_limit = min(vmem_cap, 56 * _MiB)
        two_cores = True
    else:
        # v5e / v6e: 128 MiB VMEM, 1 TC.  Big row tiles keep the weight stream
        # above the MXU roofline; th=1024 halves grid steps along H where it divides.
        tm_target, th_target = 1024, 1024
        vmem_limit = min(vmem_cap, 100 * _MiB)
        two_cores = False

    th = _divisor_tile(H, th_target) or H
    tm = _round_up(min(tm_target, M), 8)

    # v7x: the row axis is the only parallel axis; make sure there are >=2 tiles
    # (otherwise one TensorCore idles) by shrinking tm for small M.
    if two_cores and _cdiv(M, tm) < 2 and M > 8:
        tm = _round_up(_cdiv(M, 2), 8)

    # Shrink until the double-buffered working set fits the VMEM budget.
    budget = vmem_limit - 6 * _MiB  # headroom for compiler-internal scratch
    while _vmem_needed(tm, th, E, x_isz, w_isz, out_isz) > budget:
        smaller_th = _divisor_tile(H, th // 2) if th > 128 else None
        if smaller_th is not None and smaller_th < th:
            th = smaller_th
        elif tm > 8:
            tm = _round_up(max(tm // 2, 8), 8)
        else:
            break

    return tm, th, vmem_limit


def feed_forward(x, w1, b1, w2, b2, *, matmul_dtype=jnp.bfloat16):
    """Fused Linear -> tanh-GELU -> Linear.

    x: (M, E) ; w1: (E, H) ; b1: (H,) ; w2: (H, E) ; b2: (E,)   (H = 4 * E)
    Weights are [in_features, out_features]: the kernel computes x @ W + b,
    equivalent to PyTorch's x @ W.T with nn.Linear weight of shape [out, in].
    For best HBM efficiency store / pass weights already in `matmul_dtype`.
    """
    M, E = x.shape
    H = w1.shape[1]
    out_dtype = x.dtype

    w_isz = jnp.dtype(matmul_dtype).itemsize
    out_isz = jnp.dtype(out_dtype).itemsize
    tm, th, vmem_limit = _select_tiles(M, E, H, w_isz, w_isz, out_isz)

    n_row_tiles = _cdiv(M, tm)
    n_h_tiles = H // th

    # Cast only if needed (avoid extra full-array HBM passes when inputs already match).
    xd = x if x.dtype == matmul_dtype else x.astype(matmul_dtype)
    w1d = w1 if w1.dtype == matmul_dtype else w1.astype(matmul_dtype)
    w2d = w2 if w2.dtype == matmul_dtype else w2.astype(matmul_dtype)
    b1_2d = b1.reshape(1, H).astype(jnp.float32)
    b2_2d = b2.reshape(1, E).astype(jnp.float32)

    cost = pl.CostEstimate(
        flops=4 * n_row_tiles * tm * E * H,            # two matmuls of 2*M*E*H each
        transcendentals=n_row_tiles * tm * H,          # one tanh per hidden element
        bytes_accessed=(M * E * w_isz                  # x
                        + 2 * E * H * w_isz * n_row_tiles  # w1+w2, re-streamed per row tile
                        + (H + E) * 4                  # biases (f32)
                        + M * E * out_isz))            # output

    out = pl.pallas_call(
        _ffn_kernel,
        out_shape=jax.ShapeDtypeStruct((M, E), out_dtype),
        grid_spec=pltpu.PrefetchScalarGridSpec(
            num_scalar_prefetch=0,
            grid=(n_row_tiles, n_h_tiles),                    # reduction (H) axis last
            in_specs=[
                pl.BlockSpec((tm, E), lambda i, h: (i, 0)),   # x row tile (full E)
                pl.BlockSpec((E, th), lambda i, h: (0, h)),   # w1 hidden tile (streams)
                pl.BlockSpec((1, th), lambda i, h: (0, h)),   # b1 hidden tile
                pl.BlockSpec((th, E), lambda i, h: (h, 0)),   # w2 hidden tile (streams)
                pl.BlockSpec((1, E), lambda i, h: (0, 0)),    # b2 (folded into acc init)
            ],
            out_specs=pl.BlockSpec((tm, E), lambda i, h: (i, 0)),
            scratch_shapes=[pltpu.VMEM((tm, E), jnp.float32)],   # resident accumulator
        ),
        compiler_params=pltpu.CompilerParams(
            dimension_semantics=("parallel", "arbitrary"),
            vmem_limit_bytes=int(vmem_limit)),
        cost_estimate=cost,
    )(xd, w1d, b1_2d, w2d, b2_2d)

    return out


def feed_forward_ref(x, w1, b1, w2, b2):
    h = x @ w1 + b1
    g = 0.5 * h * (1.0 + jnp.tanh(jnp.sqrt(2.0 / jnp.pi) * (h + 0.044715 * h ** 3)))
    return g @ w2 + b2


if __name__ == "__main__":
    # cfg['emb_dim'] = 32  -> hidden = 4 * 32 = 128
    batch, seq, emb_dim = 2, 8, 32
    hidden = 4 * emb_dim

    key = jax.random.PRNGKey(0)
    kx, kw1, kb1, kw2, kb2 = jax.random.split(key, 5)

    x = jax.random.normal(kx, (batch, seq, emb_dim), dtype=jnp.float32)
    w1 = jax.random.normal(kw1, (emb_dim, hidden), dtype=jnp.float32) * 0.02
    b1 = jax.random.normal(kb1, (hidden,), dtype=jnp.float32) * 0.02
    w2 = jax.random.normal(kw2, (hidden, emb_dim), dtype=jnp.float32) * 0.02
    b2 = jax.random.normal(kb2, (emb_dim,), dtype=jnp.float32) * 0.02

    x2d = x.reshape(batch * seq, emb_dim)
    ref2d = feed_forward_ref(x2d, w1, b1, w2, b2)

    # Default (performance) path: bf16 MXU inputs, f32 accumulation + GELU.
    out2d = feed_forward(x2d, w1, b1, w2, b2)
    out = out2d.reshape(batch, seq, emb_dim)
    jax.block_until_ready(out)
    assert out.shape == (batch, seq, emb_dim)
    assert jnp.allclose(out2d, ref2d, atol=3e-3, rtol=3e-2), "bf16-MXU path mismatch"

    # Full-f32 path: tight tolerance against the plain-JAX reference.
    out2d_f32 = feed_forward(x2d, w1, b1, w2, b2, matmul_dtype=jnp.float32)
    jax.block_until_ready(out2d_f32)
    assert jnp.allclose(out2d_f32, ref2d, atol=1e-5, rtol=1e-5), "f32 path mismatch"

    print("KERNEL_OK")
</pallas_src>

<mosaic_0001>
module attributes {stable_mosaic.version = 11 : i64} {
  func.func @_ffn_kernel(%arg0: i32, %arg1: i32, %arg2: memref<8x32xbf16, #tpu.memory_space<vmem>>, %arg3: memref<32x128xbf16, #tpu.memory_space<vmem>>, %arg4: memref<1x128xf32, #tpu.memory_space<vmem>>, %arg5: memref<128x32xbf16, #tpu.memory_space<vmem>>, %arg6: memref<1x32xf32, #tpu.memory_space<vmem>>, %arg7: memref<8x32xf32, #tpu.memory_space<vmem>>, %arg8: memref<8x32xf32, #tpu.memory_space<vmem>>) attributes {dimension_semantics = [#tpu.dimension_semantics<parallel>, #tpu.dimension_semantics<arbitrary>], iteration_bounds = array<i64: 2, 1>, scalar_prefetch = 0 : i64, scratch_operands = 1 : i64, tpu.core_type = #tpu.core_type<tc>, window_params = [{transform_indices = @transform_0, window_bounds = array<i64: 8, 32>}, {transform_indices = @transform_1, window_bounds = array<i64: 32, 128>}, {transform_indices = @transform_2, window_bounds = array<i64: 1, 128>}, {transform_indices = @transform_3, window_bounds = array<i64: 128, 32>}, {pipeline_mode = #tpu.pipeline_mode<synchronous>, transform_indices = @transform_4, window_bounds = array<i64: 1, 32>}, {transform_indices = @transform_5, window_bounds = array<i64: 8, 32>}]} {
    %c0_i32 = arith.constant 0 : i32
    %0 = arith.cmpi eq, %arg1, %c0_i32 : i32
    %1 = arith.extui %0 : i1 to i32
    %c0_i32_0 = arith.constant 0 : i32
    %2 = arith.cmpi ne, %1, %c0_i32_0 : i32
    scf.if %2 {
      %c0_20 = arith.constant 0 : index
      %c0_21 = arith.constant 0 : index
      %32 = vector.load %arg6[%c0_20, %c0_21] : memref<1x32xf32, #tpu.memory_space<vmem>>, vector<1x32xf32>
      %33 = vector.shape_cast %32 : vector<1x32xf32> to vector<1x32xf32>
      %34 = vector.broadcast %33 : vector<1x32xf32> to vector<8x32xf32>
      %c0_22 = arith.constant 0 : index
      %c0_23 = arith.constant 0 : index
      %35 = vector.load %arg8[%c0_22, %c0_23] : memref<8x32xf32, #tpu.memory_space<vmem>>, vector<8x32xf32>
      tpu.vector_store %arg8[%c0_22, %c0_23], %34 {strides = array<i32>} : memref<8x32xf32, #tpu.memory_space<vmem>>, vector<8x32xf32>,
    } else {
    }
    %c0 = arith.constant 0 : index
    %c0_1 = arith.constant 0 : index
    %3 = vector.load %arg2[%c0, %c0_1] : memref<8x32xbf16, #tpu.memory_space<vmem>>, vector<8x32xbf16>
    %c0_2 = arith.constant 0 : index
    %c0_3 = arith.constant 0 : index
    %4 = vector.load %arg3[%c0_2, %c0_3] : memref<32x128xbf16, #tpu.memory_space<vmem>>, vector<32x128xbf16>
    %cst = arith.constant dense<0.000000e+00> : vector<8x128xf32>
    %5 = tpu.matmul %3, %4, %cst {dimension_numbers = #tpu.dot_dimension_numbers<[1], [0], [0], [1], [0, 0, 1, 1], [], []>} : vector<8x32xbf16>, vector<32x128xbf16>, vector<8x128xf32> -> vector<8x128xf32>
    %c0_4 = arith.constant 0 : index
    %c0_5 = arith.constant 0 : index
    %6 = vector.load %arg4[%c0_4, %c0_5] : memref<1x128xf32, #tpu.memory_space<vmem>>, vector<1x128xf32>
    %7 = vector.broadcast %6 : vector<1x128xf32> to vector<8x128xf32>
    %8 = arith.addf %5, %7 : vector<8x128xf32>
    %9 = arith.mulf %8, %8 : vector<8x128xf32>
    %cst_6 = arith.constant 4.471500e-02 : f32
    %10 = vector.broadcast %cst_6 : f32 to vector<8x128xf32>
    %11 = arith.mulf %10, %9 : vector<8x128xf32>
    %cst_7 = arith.constant 1.000000e+00 : f32
    %12 = vector.broadcast %cst_7 : f32 to vector<8x128xf32>
    %13 = arith.addf %12, %11 : vector<8x128xf32>
    %14 = arith.mulf %8, %13 : vector<8x128xf32>
    %cst_8 = arith.constant 0.797884583 : f32
    %15 = vector.broadcast %cst_8 : f32 to vector<8x128xf32>
    %16 = arith.mulf %15, %14 : vector<8x128xf32>
    %cst_9 = arith.constant 5.000000e-01 : f32
    %17 = vector.broadcast %cst_9 : f32 to vector<8x128xf32>
    %18 = arith.mulf %17, %8 : vector<8x128xf32>
    %19 = math.tanh %16 : vector<8x128xf32>
    %cst_10 = arith.constant 1.000000e+00 : f32
    %20 = vector.broadcast %cst_10 : f32 to vector<8x128xf32>
    %21 = arith.addf %20, %19 : vector<8x128xf32>
    %22 = arith.mulf %18, %21 : vector<8x128xf32>
    %c0_11 = arith.constant 0 : index
    %c0_12 = arith.constant 0 : index
    %23 = vector.load %arg8[%c0_11, %c0_12] : memref<8x32xf32, #tpu.memory_space<vmem>>, vector<8x32xf32>
    %24 = arith.truncf %22 : vector<8x128xf32> to vector<8x128xbf16>
    %c0_13 = arith.constant 0 : index
    %c0_14 = arith.constant 0 : index
    %25 = vector.load %arg5[%c0_13, %c0_14] : memref<128x32xbf16, #tpu.memory_space<vmem>>, vector<128x32xbf16>
    %cst_15 = arith.constant dense<0.000000e+00> : vector<8x32xf32>
    %26 = tpu.matmul %24, %25, %cst_15 {dimension_numbers = #tpu.dot_dimension_numbers<[1], [0], [0], [1], [0, 0, 1, 1], [], []>} : vector<8x128xbf16>, vector<128x32xbf16>, vector<8x32xf32> -> vector<8x32xf32>
    %27 = arith.addf %23, %26 : vector<8x32xf32>
    %c0_16 = arith.constant 0 : index
    %c0_17 = arith.constant 0 : index
    %28 = vector.load %arg8[%c0_16, %c0_17] : memref<8x32xf32, #tpu.memory_space<vmem>>, vector<8x32xf32>
    tpu.vector_store %arg8[%c0_16, %c0_17], %27 {strides = array<i32>} : memref<8x32xf32, #tpu.memory_space<vmem>>, vector<8x32xf32>,
    %c0_i32_18 = arith.constant 0 : i32
    %29 = arith.cmpi eq, %arg1, %c0_i32_18 : i32
    %30 = arith.extui %29 : i1 to i32
    %c0_i32_19 = arith.constant 0 : i32
    %31 = arith.cmpi ne, %30, %c0_i32_19 : i32
    scf.if %31 {
      %c0_20 = arith.constant 0 : index
      %c0_21 = arith.constant 0 : index
      %32 = vector.load %arg8[%c0_20, %c0_21] : memref<8x32xf32, #tpu.memory_space<vmem>>, vector<8x32xf32>
      %c0_22 = arith.constant 0 : index
      %c0_23 = arith.constant 0 : index
      %33 = vector.load %arg7[%c0_22, %c0_23] : memref<8x32xf32, #tpu.memory_space<vmem>>, vector<8x32xf32>
      tpu.vector_store %arg7[%c0_22, %c0_23], %32 {strides = array<i32>} : memref<8x32xf32, #tpu.memory_space<vmem>>, vector<8x32xf32>,
    } else {
    }
    return
  }
  func.func @transform_0(%arg0: i32, %arg1: i32) -> (i32, i32) {
    %c0_i32 = arith.constant 0 : i32
    %c0_i32_0 = arith.constant 0 : i32
    return %arg0, %c0_i32 : i32, i32
  }
  func.func @transform_1(%arg0: i32, %arg1: i32) -> (i32, i32) {
    %c0_i32 = arith.constant 0 : i32
    %c0_i32_0 = arith.constant 0 : i32
    return %c0_i32, %arg1 : i32, i32
  }
  func.func @transform_2(%arg0: i32, %arg1: i32) -> (i32, i32) {
    %c0_i32 = arith.constant 0 : i32
    %c0_i32_0 = arith.constant 0 : i32
    return %c0_i32, %arg1 : i32, i32
  }
  func.func @transform_3(%arg0: i32, %arg1: i32) -> (i32, i32) {
    %c0_i32 = arith.constant 0 : i32
    %c0_i32_0 = arith.constant 0 : i32
    return %arg1, %c0_i32 : i32, i32
  }
  func.func @transform_4(%arg0: i32, %arg1: i32) -> (i32, i32) {
    %c0_i32 = arith.constant 0 : i32
    %c0_i32_0 = arith.constant 0 : i32
    %c0_i32_1 = arith.constant 0 : i32
    return %c0_i32, %c0_i32_0 : i32, i32
  }
  func.func @transform_5(%arg0: i32, %arg1: i32) -> (i32, i32) {
    %c0_i32 = arith.constant 0 : i32
    %c0_i32_0 = arith.constant 0 : i32
    return %arg0, %c0_i32 : i32, i32
  }
}

</mosaic_0001>

<llo_original>
// kernel: tpu_custom_call.1
$region0: #{tpu_custom_call.1}
  #allocation0 [shape = 'u32[]', space=smem, size = 0x4, offset = 0x4, fixed_abs, tag = 'smem constant byte address 0x4 - core index']
  #allocation1 [shape = 'u32[144,128]{1,0:T(1,128)}', space=vmem, size = 0x12000, scoped, tag = 'internal scratch']
  #allocation2 [shape = 'f32[8,32]{1,0:T(8,128)}', space=vmem, size = 0x1000, scoped, tag = 'scratch operand']
  %s0 = inlined_call_operand.vmem [shape: bf16[16,32], index: 0, kind: input, shape index: {}]
  %s1 = inlined_call_operand.vmem [shape: bf16[32,128], index: 1, kind: input, shape index: {}]
  %s2 = inlined_call_operand.vmem [shape: f32[1,128], index: 2, kind: input, shape index: {}]
  %s3 = inlined_call_operand.vmem [shape: bf16[128,32], index: 3, kind: input, shape index: {}]
  %s4 = inlined_call_operand.vmem [shape: f32[1,32], index: 4, kind: input, shape index: {}]
  %s5 = inlined_call_operand.hbm [shape: f32[16,32], index: 5, kind: output, shape index: {}]
  %s6 = sld [smem:[#allocation0]]
  $region61: #{tpu_custom_call.1} parent=0
    _
  %s8 = ssub.s32 1, %s6
  %s9 = scalar_select 0, %s8, %s6
  $region1: #{tpu_custom_call.1} parent=0
    #allocation3 [shape = 'u8[8192]{0}', space=vmem, size = 0x2000, scoped, tag = 'output window, operand 0']
    #allocation4 [shape = 's32[2]{0}', space=sflag, size = 0x8, scoped, tag = 'scoped memory for tpu_custom_call.1']
    %10 = vsyncpa [#allocation4], 0
    %s11 = scalar_lea.sflag [#allocation4], 1
    %12 = vsyncpa %s11, 0
    loop: start=0, step=1, limit=4
    $region2: #{tpu_custom_call.1} parent=1 // loop_pre_header
      _
    $region3: #{tpu_custom_call.1} parent=1 // loop_header
      %s14 = sphi 0, %s18
      %p15 = scmp.ge.s32.totalorder %s14, 4
      %s21 = sphi 0, %s33
      %s22 = sphi 0, %s29
      %s23 = sphi 0, %s21
      %s24 = sphi 0, %s22
      %s25 = sphi 0, %s23
      %s26 = sphi 0, %s24
      %s36 = sphi 0, %s38
      %s39 = sphi 0, %s36
      %s40 = sphi 0, %s39
      %s56 = sphi 0, %s40
      %s62 = sphi 0, %s64
      %s65 = sphi 0, %s62
      %s66 = sphi 0, %s65
      %s82 = sphi 0, %s66
      %s88 = sphi 0, %s90
      %s91 = sphi 0, %s88
      %s92 = sphi 0, %s91
      %s108 = sphi 0, %s92
      %s114 = sphi 0, %s116
      %s117 = sphi 0, %s114
      %s118 = sphi 0, %s117
      %s134 = sphi 0, %s118
      %s138 = sphi 0, %s138
      %s140 = sphi 0, %s138
      %s141 = sphi 0, %s140
      %s155 = sphi 0, %s141
      %s161 = sphi 0, %s163
      %s164 = sphi 0, %s161
      %s165 = sphi 0, %s164
      %s181 = sphi 0, %s165
    $region4: #{tpu_custom_call.1} parent=1 // loop_header_branch
      %17 = sbr.rel (%p15) target = $region8
    $region5: #{tpu_custom_call.1} parent=1 // loop_body
      %s19 = ssub.s32 %s14, 1
      %s20 = ssub.s32 %s14, 2
      %s27 = sadd.s32 1, %s22
      %p28 = scmp.ge.s32.totalorder %s27, 1
      %s29 = scalar_select %p28, 0, %s27
      %s30 = sadd.s32 1, %s21
      %s31 = scalar_select %p28, %s30, %s21
      %p32 = scmp.ge.s32.totalorder %s31, 2
      %s33 = scalar_select %p32, 0, %s31
      %s34 = ssub.s32 %s21, %s33
      %p35 = scmp.eq.s32.totalorder %s34, 0
      %s37 = sadd.s32 %s36, 1
      %s38 = scalar_select %p35, %s36, %s37
      %p41 = pneg %p35
      %p42 = scmp.eq.s32.totalorder %s14, 1
      %p43 = por %p41, %p42
      %p44 = scmp.ne.s32.totalorder %s36, %s39
      %p45 = scmp.eq.s32.totalorder %s14, 0
      %p46 = por %p44, %p45
      %p47 = scmp.ne.s32.totalorder %s36, %s39
      %p48 = scmp.eq.s32.totalorder %s19, 1
      %p49 = por %p47, %p48
      %p50 = scmp.ne.s32.totalorder %s39, %s40
      %p51 = scmp.eq.s32.totalorder %s19, 0
      %p52 = por %p50, %p51
      %p53 = scmp.ne.s32.totalorder %s39, %s40
      %p54 = scmp.eq.s32.totalorder %s20, 1
      %p55 = por %p53, %p54
      %p57 = scmp.ne.s32.totalorder %s40, %s56
      %p58 = scmp.eq.s32.totalorder %s20, 0
      %p59 = por %p57, %p58
      %s60 = ssub.s32 %s22, %s29
      %p61 = scmp.eq.s32.totalorder %s60, 0
      %s63 = sadd.s32 %s62, 1
      %s64 = scalar_select %p61, %s62, %s63
      %p67 = pneg %p61
      %p68 = scmp.eq.s32.totalorder %s14, 1
      %p69 = por %p67, %p68
      %p70 = scmp.ne.s32.totalorder %s62, %s65
      %p71 = scmp.eq.s32.totalorder %s14, 0
      %p72 = por %p70, %p71
      %p73 = scmp.ne.s32.totalorder %s62, %s65
      %p74 = scmp.eq.s32.totalorder %s19, 1
      %p75 = por %p73, %p74
      %p76 = scmp.ne.s32.totalorder %s65, %s66
      %p77 = scmp.eq.s32.totalorder %s19, 0
      %p78 = por %p76, %p77
      %p79 = scmp.ne.s32.totalorder %s65, %s66
      %p80 = scmp.eq.s32.totalorder %s20, 1
      %p81 = por %p79, %p80
      %p83 = scmp.ne.s32.totalorder %s66, %s82
      %p84 = scmp.eq.s32.totalorder %s20, 0
      %p85 = por %p83, %p84
      %s86 = ssub.s32 %s22, %s29
      %p87 = scmp.eq.s32.totalorder %s86, 0
      %s89 = sadd.s32 %s88, 1
      %s90 = scalar_select %p87, %s88, %s89
      %p93 = pneg %p87
      %p94 = scmp.eq.s32.totalorder %s14, 1
      %p95 = por %p93, %p94
      %p96 = scmp.ne.s32.totalorder %s88, %s91
      %p97 = scmp.eq.s32.totalorder %s14, 0
      %p98 = por %p96, %p97
      %p99 = scmp.ne.s32.totalorder %s88, %s91
      %p100 = scmp.eq.s32.totalorder %s19, 1
      %p101 = por %p99, %p100
      %p102 = scmp.ne.s32.totalorder %s91, %s92
      %p103 = scmp.eq.s32.totalorder %s19, 0
      %p104 = por %p102, %p103
      %p105 = scmp.ne.s32.totalorder %s91, %s92
      %p106 = scmp.eq.s32.totalorder %s20, 1
      %p107 = por %p105, %p106
      %p109 = scmp.ne.s32.totalorder %s92, %s108
      %p110 = scmp.eq.s32.totalorder %s20, 0
      %p111 = por %p109, %p110
      %s112 = ssub.s32 %s22, %s29
      %p113 = scmp.eq.s32.totalorder %s112, 0
      %s115 = sadd.s32 %s114, 1
      %s116 = scalar_select %p113, %s114, %s115
      %p119 = pneg %p113
      %p120 = scmp.eq.s32.totalorder %s14, 1
      %p121 = por %p119, %p120
      %p122 = scmp.ne.s32.totalorder %s114, %s117
      %p123 = scmp.eq.s32.totalorder %s14, 0
      %p124 = por %p122, %p123
      %p125 = scmp.ne.s32.totalorder %s114, %s117
      %p126 = scmp.eq.s32.totalorder %s19, 1
      %p127 = por %p125, %p126
      %p128 = scmp.ne.s32.totalorder %s117, %s118
      %p129 = scmp.eq.s32.totalorder %s19, 0
      %p130 = por %p128, %p129
      %p131 = scmp.ne.s32.totalorder %s117, %s118
      %p132 = scmp.eq.s32.totalorder %s20, 1
      %p133 = por %p131, %p132
      %p135 = scmp.ne.s32.totalorder %s118, %s134
      %p136 = scmp.eq.s32.totalorder %s20, 0
      %p137 = por %p135, %p136
      %s139 = sadd.s32 %s138, 1
      %p142 = scmp.eq.s32.totalorder %s14, 1
      %p143 = scmp.ne.s32.totalorder %s138, %s140
      %p144 = scmp.eq.s32.totalorder %s14, 0
      %p145 = por %p143, %p144
      %p146 = scmp.ne.s32.totalorder %s138, %s140
      %p147 = scmp.eq.s32.totalorder %s19, 1
      %p148 = por %p146, %p147
      %p149 = scmp.ne.s32.totalorder %s140, %s141
      %p150 = scmp.eq.s32.totalorder %s19, 0
      %p151 = por %p149, %p150
      %p152 = scmp.ne.s32.totalorder %s140, %s141
      %p153 = scmp.eq.s32.totalorder %s20, 1
      %p154 = por %p152, %p153
      %p156 = scmp.ne.s32.totalorder %s141, %s155
      %p157 = scmp.eq.s32.totalorder %s20, 0
      %p158 = por %p156, %p157
      %s159 = ssub.s32 %s21, %s33
      %p160 = scmp.eq.s32.totalorder %s159, 0
      %s162 = sadd.s32 %s161, 1
      %s163 = scalar_select %p160, %s161, %s162
      %p166 = pneg %p160
      %p167 = scmp.eq.s32.totalorder %s14, 1
      %p168 = por %p166, %p167
      %p169 = scmp.ne.s32.totalorder %s161, %s164
      %p170 = scmp.eq.s32.totalorder %s14, 0
      %p171 = por %p169, %p170
      %p172 = scmp.ne.s32.totalorder %s161, %s164
      %p173 = scmp.eq.s32.totalorder %s19, 1
      %p174 = por %p172, %p173
      %p175 = scmp.ne.s32.totalorder %s164, %s165
      %p176 = scmp.eq.s32.totalorder %s19, 0
      %p177 = por %p175, %p176
      %p178 = scmp.ne.s32.totalorder %s164, %s165
      %p179 = scmp.eq.s32.totalorder %s20, 1
      %p180 = por %p178, %p179
      %p182 = scmp.ne.s32.totalorder %s165, %s181
      %p183 = scmp.eq.s32.totalorder %s20, 0
      %p184 = por %p182, %p183
      %p185 = scmp.le.s32.totalorder 1, %s14
      %p186 = scmp.lt.s32.totalorder %s14, 3
      %p187 = pnand %p185, %p186
      %p188 = pneg %p187
      // Predicated region
      $region9: #{tpu_custom_call.1} parent=5 // pred_check
        _
      $region10: #{tpu_custom_call.1} parent=5 // pred_check_branch
        %190 = sbr.rel (%p187) target = $region12
      $region11: #{tpu_custom_call.1} parent=5 // pred_region
        %s191 = ssub.s32 %s14, 1
        // Predicated region
        $region13: #{tpu_custom_call.1} parent=11 // pred_check
          %p192 = pneg %p78
        $region14: #{tpu_custom_call.1} parent=11 // pred_check_branch
          %194 = sbr.rel (%p192) target = $region16
        $region15: #{tpu_custom_call.1} parent=11 // pred_region
          %p195 = scmp.lt.s32.totalorder %s24, 0
          %s196 = scalar_select %p195, %s24, 0
          %s197 = smul.addr %s196, 4
          %s198 = scalar_lea.vmem %s1, %s197
        $region16: #{tpu_custom_call.1} parent=11 // pred_fallthru
          _
        // Predicated region
        $region17: #{tpu_custom_call.1} parent=11 // pred_check
          %p199 = pneg %p104
        $region18: #{tpu_custom_call.1} parent=11 // pred_check_branch
          %201 = sbr.rel (%p199) target = $region20
        $region19: #{tpu_custom_call.1} parent=11 // pred_region
          %p202 = scmp.lt.s32.totalorder %s24, 0
          %s203 = scalar_select %p202, %s24, 0
          %s204 = scalar_lea.vmem %s2, %s203
        $region20: #{tpu_custom_call.1} parent=11 // pred_fallthru
          _
        // Predicated region
        $region21: #{tpu_custom_call.1} parent=11 // pred_check
          %p205 = pneg %p130
        $region22: #{tpu_custom_call.1} parent=11 // pred_check_branch
          %207 = sbr.rel (%p205) target = $region24
        $region23: #{tpu_custom_call.1} parent=11 // pred_region
          %s208 = smul.u32 16, %s24
          %p209 = scmp.lt.s32.totalorder %s208, 15
          %s210 = scalar_select %p209, %s208, 15
          %s211 = smul.addr %s210, 4
          %s212 = scalar_lea.vmem %s3, %s211
          %s213 = smul.u32 16, %s24
        $region24: #{tpu_custom_call.1} parent=11 // pred_fallthru
          _
        // Predicated region
        $region25: #{tpu_custom_call.1} parent=11 // pred_check
          %p214 = pneg %p151
        $region26: #{tpu_custom_call.1} parent=11 // pred_check_branch
          %216 = sbr.rel (%p214) target = $region28
        $region27: #{tpu_custom_call.1} parent=11 // pred_region
          _
        $region28: #{tpu_custom_call.1} parent=11 // pred_fallthru
          _
      $region12: #{tpu_custom_call.1} parent=5 // pred_fallthru
        _
      %p217 = scmp.lt.s32.totalorder %s14, 2
      // Predicated region
      $region29: #{tpu_custom_call.1} parent=5 // pred_check
        %p218 = pneg %p217
      $region30: #{tpu_custom_call.1} parent=5 // pred_check_branch
        %220 = sbr.rel (%p218) target = $region32
      $region31: #{tpu_custom_call.1} parent=5 // pred_region
        // Predicated region
        $region33: #{tpu_custom_call.1} parent=31 // pred_check
          %p221 = pneg %p46
        $region34: #{tpu_custom_call.1} parent=31 // pred_check_branch
          %223 = sbr.rel (%p221) target = $region36
        $region35: #{tpu_custom_call.1} parent=31 // pred_region
          %p224 = scmp.lt.s32.totalorder %s21, 1
          %s225 = scalar_select %p224, %s21, 1
          %s226 = smul.addr %s225, 4
          %s227 = scalar_lea.vmem %s0, %s226
        $region36: #{tpu_custom_call.1} parent=31 // pred_fallthru
          _
      $region32: #{tpu_custom_call.1} parent=5 // pred_fallthru
        _
      %p228 = scmp.le.s32.totalorder 1, %s14
      %p229 = scmp.lt.s32.totalorder %s14, 3
      %p230 = pnand %p228, %p229
      %p231 = pneg %p230
      // Predicated region
      $region37: #{tpu_custom_call.1} parent=5 // pred_check
        _
      $region38: #{tpu_custom_call.1} parent=5 // pred_check_branch
        %233 = sbr.rel (%p230) target = $region40
      $region39: #{tpu_custom_call.1} parent=5 // pred_region
        %s234 = ssub.s32 %s14, 1
        %p235 = scmp.lt.s32.totalorder %s23, 1
        %s236 = scalar_select %p235, %s23, 1
        %s237 = smul.addr %s236, 4
        %s238 = scalar_lea.vmem %s0, %s237
        %p239 = pneg %p52
        %p240 = pneg %p49
        %p241 = scmp.lt.s32.totalorder %s24, 0
        %s242 = scalar_select %p241, %s24, 0
        %s243 = smul.addr %s242, 4
        %s244 = scalar_lea.vmem %s1, %s243
        %p245 = pneg %p78
        %p246 = pneg %p75
        %p247 = scmp.lt.s32.totalorder %s24, 0
        %s248 = scalar_select %p247, %s24, 0
        %s249 = scalar_lea.vmem %s2, %s248
        %p250 = pneg %p104
        %p251 = pneg %p101
        %s252 = smul.u32 16, %s24
        %p253 = scmp.lt.s32.totalorder %s252, 15
        %s254 = scalar_select %p253, %s252, 15
        %s255 = smul.addr %s254, 4
        %s256 = scalar_lea.vmem %s3, %s255
        %p257 = pneg %p130
        %p258 = pneg %p127
        %p259 = pneg %p151
        %p260 = pneg %p148
        %p261 = pneg %p177
        %p262 = pneg %p174
        %s263 = sand.u32 %s164, 1
        %s264 = scalar_lea.sflag [#allocation4], %s263
        %s265 = sand.u32 %s164, 1
        %s266 = smul.addr %s265, 8
        %s267 = scalar_lea.vmem [#allocation3], %s266
        %p268 = scmp.lt.s32.totalorder %s23, 1
        %s269 = scalar_select %p268, %s23, 1
        %s270 = smul.addr %s269, 4
        %s271 = scalar_lea.vmem %s0, %s270
        %p272 = scmp.lt.s32.totalorder %s24, 0
        %s273 = scalar_select %p272, %s24, 0
        %s274 = smul.addr %s273, 4
        %s275 = scalar_lea.vmem %s1, %s274
        %p276 = scmp.lt.s32.totalorder %s24, 0
        %s277 = scalar_select %p276, %s24, 0
        %s278 = scalar_lea.vmem %s2, %s277
        %s279 = smul.u32 16, %s24
        %p280 = scmp.lt.s32.totalorder %s279, 15
        %s281 = scalar_select %p280, %s279, 15
        %s282 = smul.addr %s281, 4
        %s283 = scalar_lea.vmem %s3, %s282
        %s284 = smul.u32 16, %s24
        %p286 = scmp.eq.s32.totalorder %s24, 0
        // Predicated region
        $region41: #{tpu_custom_call.1} parent=39 // pred_check
          %p287 = pneg %p286
        $region42: #{tpu_custom_call.1} parent=39 // pred_check_branch
          %289 = sbr.rel (%p287) target = $region44
        $region43: #{tpu_custom_call.1} parent=39 // pred_region
          %v290 = vld [vmem:[%s4] sm:$0x1]
          %v292 = vlaneseq
          %v293 = vshrl.u32 %v292, 7
          %v294 = vsub.s32 0, %v293
          %v295 = vrot.slane %v290, %v294
          %vm297 = vcmask 261120
          %298 = vst.msk [vmem:[#allocation2] sm:$0xff] %vm297, %v295
        $region44: #{tpu_custom_call.1} parent=39 // pred_fallthru
          _
        %v299 = vld [vmem:[%s271] sm:$0xf]
        %v300 = vld [vmem:[%s275] sm:$0xf]
        %v301 = vld [vmem:[%s275 + $0x4] sm:$0xf]
        %v302 = vld [vmem:[%s275 + $0x8] sm:$0xf]
        %v303 = vld [vmem:[%s275 + $0xc] sm:$0xf]
        %v304 = vld [vmem:[%s278] sm:$0x1]
        %v306 = vlaneseq
        %v307 = vshrl.u32 %v306, 7
        %v308 = vsub.s32 0, %v307
        %v309 = vrot.slane %v304, %v308
        %v315 = vunpack.c.l.b16 %v300
        %v316 = vunpack.c.l.b16 %v301
        %v317 = vunpack.c.l.b16 %v302
        %v318 = vunpack.c.l.b16 %v303
        %v319 = vpack.c.b16 %v316, %v315
        %v320 = vpack.c.b16 %v318, %v317
        %vm323 = vcmask 261120
        %v325 = vsel %vm323, %v299, 0
        %327 = vmatprep.subr.bf16.mxu0 0
        %328 = vmatpush1.bf16.msra.mxu0 0
        %329 = vmatprep.subr.bf16.mxu0 0
        %330 = vmatpush1.bf16.msra.mxu0 0
        %331 = vmatprep.subr.bf16.mxu0 0
        %332 = vmatpush1.bf16.msra.mxu0 0
        %333 = vmatprep.subr.bf16.mxu0 0
        %334 = vmatpush1.bf16.msra.mxu0 0
        %335 = vmatprep.subr.bf16.mxu0 0
        %336 = vmatpush1.bf16.msra.mxu0 0
        %337 = vmatprep.subr.bf16.mxu0 0
        %338 = vmatpush1.bf16.msra.mxu0 0
        %339 = vmatprep.subr.bf16.mxu0 0
        %340 = vmatpush1.bf16.msra.mxu0 %v320
        %341 = vmatprep.subr.bf16.mxu0 0
        %342 = vmatpush1.bf16.msra.mxu0 %v319
        %343 = vmatprep.subr.bf16.mxu0 0
        %344 = vmatpush2.bf16.msra.mxu0 0
        %345 = vmatprep.subr.bf16.mxu0 0
        %346 = vmatpush2.bf16.msra.mxu0 0
        %347 = vmatprep.subr.bf16.mxu0 0
        %348 = vmatpush2.bf16.msra.mxu0 0
        %349 = vmatprep.subr.bf16.mxu0 0
        %350 = vmatpush2.bf16.msra.mxu0 0
        %351 = vmatprep.subr.bf16.mxu0 0
        %352 = vmatpush2.bf16.msra.mxu0 0
        %353 = vmatprep.subr.bf16.mxu0 0
        %354 = vmatpush2.bf16.msra.mxu0 0
        %355 = vmatprep.subr.bf16.mxu0 0
        %356 = vmatpush2.bf16.msra.mxu0 0
        %357 = vmatprep.subr.bf16.mxu0 0
        %358 = vmatpush2.bf16.msra.mxu0 0
        %359 = vmatprep.mubr.bf16.mxu0 0
        %360 = vmatmul.mubr.bf16.gmra.mxu0 %v325
        %v361 = vpop.f32.mrf.mxu0
        %v362 = vadd.f32 %v309, %v361
        %v363 = vpop.f32.mrf.mxu0
        %v364 = vpop.f32.mrf.mxu0
        %v365 = vpop.f32.mrf.mxu0
        %366 = vdwg.mxu0
        %v367 = vmul.f32 %v362, %v362
        %v368 = vmul.f32 %v367, 0.044715
        %v369 = vadd.f32 %v368, 1.0
        %v370 = vmul.f32 %v362, %v369
        %v371 = vmul.f32 %v370, 0.7978846
        %v372 = vmul.f32 %v362, 0.5
        %v373 = vtanh.pop %v371
        %v374 = vadd.f32 %v373, 1.0
        %v375 = vmul.f32 %v372, %v374
        %v376 = vld [vmem:[#allocation2] sm:$0xff]
        %v377 = vpack.c.bf16 %v375, %v375
        %v378 = vld [vmem:[%s283] sm:$0xf]
        %v379 = vld [vmem:[%s283 + $0x4] sm:$0xf]
        %v380 = vld [vmem:[%s283 + $0x8] sm:$0xf]
        %v381 = vld [vmem:[%s283 + $0xc] sm:$0xf]
        %v382 = vld [vmem:[%s283 + $0x10] sm:$0xf]
        %v383 = vld [vmem:[%s283 + $0x14] sm:$0xf]
        %v384 = vld [vmem:[%s283 + $0x18] sm:$0xf]
        %v385 = vld [vmem:[%s283 + $0x1c] sm:$0xf]
        %v386 = vld [vmem:[%s283 + $0x20] sm:$0xf]
        %v387 = vld [vmem:[%s283 + $0x24] sm:$0xf]
        %v388 = vld [vmem:[%s283 + $0x28] sm:$0xf]
        %v389 = vld [vmem:[%s283 + $0x2c] sm:$0xf]
        %v390 = vld [vmem:[%s283 + $0x30] sm:$0xf]
        %v391 = vld [vmem:[%s283 + $0x34] sm:$0xf]
        %v392 = vld [vmem:[%s283 + $0x38] sm:$0xf]
        %v393 = vld [vmem:[%s283 + $0x3c] sm:$0xf]
        %v410 = vunpack.c.l.b16 %v378
        %v411 = vunpack.c.l.b16 %v379
        %v412 = vunpack.c.l.b16 %v380
        %v413 = vunpack.c.l.b16 %v381
        %v414 = vunpack.c.l.b16 %v382
        %v415 = vunpack.c.l.b16 %v383
        %v416 = vunpack.c.l.b16 %v384
        %v417 = vunpack.c.l.b16 %v385
        %v418 = vunpack.c.l.b16 %v386
        %v419 = vunpack.c.l.b16 %v387
        %v420 = vunpack.c.l.b16 %v388
        %v421 = vunpack.c.l.b16 %v389
        %v422 = vunpack.c.l.b16 %v390
        %v423 = vunpack.c.l.b16 %v391
        %v424 = vunpack.c.l.b16 %v392
        %v425 = vunpack.c.l.b16 %v393
        %v426 = vpack.c.b16 %v411, %v410
        %v427 = vpack.c.b16 %v413, %v412
        %v428 = vpack.c.b16 %v415, %v414
        %v429 = vpack.c.b16 %v417, %v416
        %v430 = vpack.c.b16 %v419, %v418
        %v431 = vpack.c.b16 %v421, %v420
        %v432 = vpack.c.b16 %v423, %v422
        %v433 = vpack.c.b16 %v425, %v424
        %442 = vmatprep.subr.bf16.mxu0 0
        %443 = vmatpush1.bf16.msra.mxu0 %v433
        %444 = vmatprep.subr.bf16.mxu0 0
        %445 = vmatpush1.bf16.msra.mxu0 %v432
        %446 = vmatprep.subr.bf16.mxu0 0
        %447 = vmatpush1.bf16.msra.mxu0 %v431
        %448 = vmatprep.subr.bf16.mxu0 0
        %449 = vmatpush1.bf16.msra.mxu0 %v430
        %450 = vmatprep.subr.bf16.mxu0 0
        %451 = vmatpush1.bf16.msra.mxu0 %v429
        %452 = vmatprep.subr.bf16.mxu0 0
        %453 = vmatpush1.bf16.msra.mxu0 %v428
        %454 = vmatprep.subr.bf16.mxu0 0
        %455 = vmatpush1.bf16.msra.mxu0 %v427
        %456 = vmatprep.subr.bf16.mxu0 0
        %457 = vmatpush1.bf16.msra.mxu0 %v426
        %458 = vmatprep.subr.bf16.mxu0 0
        %459 = vmatpush2.bf16.msra.mxu0 0
        %460 = vmatprep.subr.bf16.mxu0 0
        %461 = vmatpush2.bf16.msra.mxu0 0
        %462 = vmatprep.subr.bf16.mxu0 0
        %463 = vmatpush2.bf16.msra.mxu0 0
        %464 = vmatprep.subr.bf16.mxu0 0
        %465 = vmatpush2.bf16.msra.mxu0 0
        %466 = vmatprep.subr.bf16.mxu0 0
        %467 = vmatpush2.bf16.msra.mxu0 0
        %468 = vmatprep.subr.bf16.mxu0 0
        %469 = vmatpush2.bf16.msra.mxu0 0
        %470 = vmatprep.subr.bf16.mxu0 0
        %471 = vmatpush2.bf16.msra.mxu0 0
        %472 = vmatprep.subr.bf16.mxu0 0
        %473 = vmatpush2.bf16.msra.mxu0 0
        %474 = vmatprep.mubr.bf16.mxu0 0
        %475 = vmatmul.mubr.bf16.gmra.mxu0 %v377
        %v476 = vpop.f32.mrf.mxu0
        %v477 = vadd.f32 0.0, %v476
        %v478 = vpop.f32.mrf.mxu0
        %v479 = vpop.f32.mrf.mxu0
        %v480 = vpop.f32.mrf.mxu0
        %481 = vdwg.mxu0
        %v482 = vadd.f32 %v376, %v477
        %483 = vst.msk [vmem:[#allocation2] sm:$0xff] %vm323, %v482
        // Predicated region
        $region45: #{tpu_custom_call.1} parent=39 // pred_check
          %p484 = pneg %p286
        $region46: #{tpu_custom_call.1} parent=39 // pred_check_branch
          %486 = sbr.rel (%p484) target = $region48
        $region47: #{tpu_custom_call.1} parent=39 // pred_region
          %v487 = vld [vmem:[#allocation2] sm:$0xff]
          %488 = vst.msk [vmem:[%s267] sm:$0xff] %vm323, %v487
        $region48: #{tpu_custom_call.1} parent=39 // pred_fallthru
          _
        %s489 = sand.u32 %s164, 1
        %s490 = scalar_lea.sflag [#allocation4], %s489
        %s491 = sand.u32 %s164, 1
        %s492 = smul.addr %s491, 8
        %s493 = scalar_lea.vmem [#allocation3], %s492
        // Predicated region
        $region49: #{tpu_custom_call.1} parent=39 // pred_check
          %p494 = pneg %p174
        $region50: #{tpu_custom_call.1} parent=39 // pred_check_branch
          %496 = sbr.rel (%p494) target = $region52
        $region51: #{tpu_custom_call.1} parent=39 // pred_region
          %s498 = ssub.s32 128, 128
          %499 = vsyncadd %s490, %s498
          %s500 = smul.addr %s23, 128
          %s501 = scalar_lea.hbm %s5, %s500
          %s503 = sshll.u32 %s493, 4
          %s504 = int_to_ptr.vmem [resolvable:$true] %s503
          %506 = dma.vmem_to_hbm [thread:$0]  %s504, 128, %s501, %s490
        $region52: #{tpu_custom_call.1} parent=39 // pred_fallthru
          _
      $region40: #{tpu_custom_call.1} parent=5 // pred_fallthru
        _
      %p507 = scmp.le.s32.totalorder 2, %s14
      // Predicated region
      $region53: #{tpu_custom_call.1} parent=5 // pred_check
        %p508 = pneg %p507
      $region54: #{tpu_custom_call.1} parent=5 // pred_check_branch
        %510 = sbr.rel (%p508) target = $region56
      $region55: #{tpu_custom_call.1} parent=5 // pred_region
        %s511 = ssub.s32 %s14, 2
        // Predicated region
        $region57: #{tpu_custom_call.1} parent=55 // pred_check
          %p512 = pneg %p180
        $region58: #{tpu_custom_call.1} parent=55 // pred_check_branch
          %514 = sbr.rel (%p512) target = $region60
        $region59: #{tpu_custom_call.1} parent=55 // pred_region
          %s515 = sand.u32 %s165, 1
          %s516 = scalar_lea.sflag [#allocation4], %s515
          %s517 = sand.u32 %s165, 1
          %s518 = smul.addr %s517, 8
          %s519 = scalar_lea.vmem [#allocation3], %s518
          %520 = dma.done %s516, 128
        $region60: #{tpu_custom_call.1} parent=55 // pred_fallthru
          _
      $region56: #{tpu_custom_call.1} parent=5 // pred_fallthru
        _
    $region6: #{tpu_custom_call.1} parent=1 // loop_footer
      %s18 = sadd.s32 1, %s14
    $region7: #{tpu_custom_call.1} parent=1 // loop_footer_branch
      %13 = sbr.rel target = $region3
    $region8: #{tpu_custom_call.1} parent=1 // loop_exit
      _
    %521 = vsyncpa [#allocation4], 1
    %s522 = scalar_lea.sflag [#allocation4], 1
    %523 = vsyncpa %s522, 1

</llo_original>
